<compile_context>
chip_gen: v7x
topology: tpu7x:2x2x1
jax: 0.10.0
libtpu: 0.0.40
codegen_flags: <defaults>
</compile_context>

<pallas_src>
import functools

import jax
import jax.numpy as jnp
from jax.experimental import pallas as pl
from jax.experimental.pallas import tpu as pltpu

_SSE_LANES = 128  # lane-dense partial-SSE block (unmasked stores)


def _vq_kernel(x_ref, e_ref, et_ref, e2h_ref, q_ref, sse_ref):
    """One grid step quantizes a (TILE_N, D) slab of flattened rows.

    x_ref   : (TILE_N, D)    VMEM -- tile of flattened inputs
    e_ref   : (K, D)         VMEM -- codebook, f32 (gather matmul operand)
    et_ref  : (D, K)         VMEM -- codebook transposed, bf16 (score matmul RHS)
    e2h_ref : (1, K)         VMEM -- 0.5 * ||E_k||^2, f32
    q_ref   : (TILE_N, D)    VMEM -- quantized output tile
    sse_ref : (1, 1, 128)    VMEM -- this tile's total SSE, broadcast over lanes
    """
    x = x_ref[...].astype(jnp.float32)                                 # (TN, D)

    # argmax_k (x . E_k - 0.5||E_k||^2) == argmin_k ||x - E_k||^2
    # (per-row ||x||^2 is constant and dropped).  bf16 inputs -> native MXU.
    score = jnp.dot(x.astype(jnp.bfloat16), et_ref[...],
                    preferred_element_type=jnp.float32)                # (TN, K)
    score = score - e2h_ref[...]

    # Direct max + compare one-hot (no iota, no index-carrying argmax reduce).
    rowmax = jnp.max(score, axis=1, keepdims=True)                     # (TN, 1)
    onehot = (score >= rowmax).astype(jnp.float32)                     # (TN, K)
    nties = jnp.sum(onehot, axis=1, keepdims=True)                     # (TN, 1)

    # Gather via one-hot matmul (MXU), f32 so code values are bit-exact.
    q = jnp.dot(onehot, e_ref[...], preferred_element_type=jnp.float32)  # (TN, D)
    # Tie handling (e.g. duplicated codebook rows): average the tied codes.
    q = q * (1.0 / nties)

    q_out = q.astype(q_ref.dtype)
    q_ref[...] = q_out

    # Partial SSE against the rounded (output-dtype) codes; fully reduced
    # in-kernel (XLU has slack), stored as one lane-dense block.
    diff = q_out.astype(jnp.float32) - x
    col = jnp.sum(diff * diff, axis=0, keepdims=True)                  # (1, D)
    tot = jnp.sum(col, axis=1, keepdims=True)                          # (1, 1)
    sse_ref[...] = jnp.broadcast_to(tot.reshape(1, 1, 1), sse_ref.shape)


def _round_up(v, m):
    return (v + m - 1) // m * m


@functools.partial(jax.jit, static_argnames=("commitment_cost", "tile_n"))
def vector_quantizer_forward(x, embeddings, commitment_cost=0.25, tile_n=512):
    """Pallas implementation of VectorQuantizer.forward.

    x:          (..., D) float array
    embeddings: (K, D)   codebook
    returns (quantized_with_same_shape_as_x, scalar_loss)
    """
    k, d = embeddings.shape
    flat_x = x.reshape(-1, d)
    n = flat_x.shape[0]

    # Row tile: big enough to amortize the ~0.35us per-step overhead and fill
    # the MXU M dim, small enough (default 512) that the (TN, K) score/one-hot
    # temporaries do not spill the vreg file.  Clamp so small inputs are not
    # over-padded and so the grid has >= 2 steps (v7x: 2 TCs share the
    # "parallel" axis).
    tile = _round_up(min(tile_n, max(n, 1)), 8)
    if n > 8:
        tile = min(tile, _round_up(-(-n // 2), 8))
    tile = max(tile, 8)
    n_pad = _round_up(n, tile)
    num_tiles = n_pad // tile

    if n_pad != n:
        # Pad with copies of code 0: padded rows quantize to (numerically)
        # themselves, contribute ~0 SSE, and are sliced off below.
        pad_rows = jnp.broadcast_to(
            embeddings[0].astype(flat_x.dtype), (n_pad - n, d))
        flat_in = jnp.concatenate([flat_x, pad_rows], axis=0)
    else:
        flat_in = flat_x

    emb_f32 = embeddings.astype(jnp.float32)
    emb_t_bf16 = emb_f32.T.astype(jnp.bfloat16)                  # (D, K) lane-dense
    e2h = 0.5 * jnp.sum(emb_f32 * emb_f32, axis=1)[None, :]      # (1, K)

    quant_pad, sse_parts = pl.pallas_call(
        _vq_kernel,
        grid=(num_tiles,),
        in_specs=[
            pl.BlockSpec((tile, d), lambda i: (i, 0)),           # x row tile
            pl.BlockSpec((k, d), lambda i: (0, 0)),              # codebook E (f32)
            pl.BlockSpec((d, k), lambda i: (0, 0)),              # E^T (bf16)
            pl.BlockSpec((1, k), lambda i: (0, 0)),              # 0.5*||E||^2
        ],
        out_specs=[
            pl.BlockSpec((tile, d), lambda i: (i, 0)),           # quantized tile
            pl.BlockSpec((1, 1, _SSE_LANES), lambda i: (i, 0, 0)),  # per-tile SSE
        ],
        out_shape=(
            jax.ShapeDtypeStruct((n_pad, d), x.dtype),
            jax.ShapeDtypeStruct((num_tiles, 1, _SSE_LANES), jnp.float32),
        ),
        compiler_params=pltpu.CompilerParams(
            dimension_semantics=("parallel",),   # no cross-iteration state
        ),
    )(flat_in, emb_f32, emb_t_bf16, e2h)

    quantized = quant_pad[:n].reshape(x.shape)
    sse = jnp.sum(sse_parts[:, 0, 0])
    mse = sse / jnp.float32(n * d)
    # e_latent_loss == q_latent_loss numerically in the forward pass
    # (detach only changes gradients), so loss = (1 + commitment_cost) * mse.
    loss = (1.0 + commitment_cost) * mse
    return quantized, loss


def _reference_forward(x, embeddings, commitment_cost):
    """Pure-JAX reference mirroring the PyTorch forward."""
    d = embeddings.shape[1]
    flat_x = x.reshape(-1, d).astype(jnp.float32)
    emb = embeddings.astype(jnp.float32)
    dist = (jnp.sum(flat_x ** 2, axis=1, keepdims=True)
            + jnp.sum(emb ** 2, axis=1)
            - 2.0 * flat_x @ emb.T)
    idx = jnp.argmin(dist, axis=1)
    q = emb[idx].astype(x.dtype).reshape(x.shape)
    mse = jnp.mean((q.reshape(-1, d).astype(jnp.float32) - flat_x) ** 2)
    return q, (1.0 + commitment_cost) * mse


def _check(x, embeddings, commitment_cost, tile_n):
    q, loss = vector_quantizer_forward(
        x, embeddings, commitment_cost=commitment_cost, tile_n=tile_n)
    jax.block_until_ready((q, loss))
    q_ref, loss_ref = _reference_forward(x, embeddings, commitment_cost)

    assert q.shape == x.shape and q.dtype == x.dtype

    d = embeddings.shape[1]
    xf = x.reshape(-1, d).astype(jnp.float32)
    err_ker = jnp.sum((q.reshape(-1, d).astype(jnp.float32) - xf) ** 2, axis=1)
    err_ref = jnp.sum((q_ref.reshape(-1, d).astype(jnp.float32) - xf) ** 2, axis=1)
    # bf16 scores may flip selection only on near-ties: the chosen code must be
    # at least as good as the reference minimum (up to rounding) and
    # near-optimal everywhere.
    assert jnp.min(err_ker - err_ref) > -1e-3
    assert jnp.max(err_ker - err_ref) < 2e-2

    # The vast majority of rows must match the reference codes exactly.
    row_match = jnp.all(
        jnp.isclose(q.reshape(-1, d), q_ref.reshape(-1, d), atol=1e-6), axis=1)
    assert jnp.mean(row_match.astype(jnp.float32)) > 0.9

    assert jnp.allclose(loss, loss_ref, atol=1e-4, rtol=1e-3)


if __name__ == "__main__":
    num_embeddings = 128
    embedding_dim = 32
    commitment_cost = 0.25

    key = jax.random.PRNGKey(0)
    kx1, kx2, ke = jax.random.split(key, 3)

    # Deterministic codebook init: uniform(-1/K, 1/K), like the nn.Embedding init.
    embeddings = jax.random.uniform(
        ke, (num_embeddings, embedding_dim), dtype=jnp.float32,
        minval=-1.0 / num_embeddings, maxval=1.0 / num_embeddings)

    # Small case: (batch=2, seq=32, D=32) -> 64 rows; clamp gives 2 x 32-row tiles.
    x1 = jax.random.normal(kx1, (2, 32, embedding_dim), dtype=jnp.float32)
    _check(x1, embeddings, commitment_cost, tile_n=512)

    # Multi-tile case with row padding: (batch=3, seq=70, D=32) -> 210 rows,
    # clamped to 2 x 112-row tiles (14 padded rows).
    x2 = jax.random.normal(kx2, (3, 70, embedding_dim), dtype=jnp.float32)
    _check(x2, embeddings, commitment_cost, tile_n=128)

    print("KERNEL_OK")
</pallas_src>

<mosaic_0001>
module attributes {stable_mosaic.version = 11 : i64} {
  func.func @_vq_kernel(%arg0: i32, %arg1: memref<32x32xf32, #tpu.memory_space<vmem>>, %arg2: memref<128x32xf32, #tpu.memory_space<vmem>>, %arg3: memref<32x128xbf16, #tpu.memory_space<vmem>>, %arg4: memref<1x128xf32, #tpu.memory_space<vmem>>, %arg5: memref<32x32xf32, #tpu.memory_space<vmem>>, %arg6: memref<1x1x128xf32, #tpu.memory_space<vmem>>) attributes {dimension_semantics = [#tpu.dimension_semantics<parallel>], iteration_bounds = array<i64: 2>, scalar_prefetch = 0 : i64, scratch_operands = 0 : i64, tpu.core_type = #tpu.core_type<tc>, window_params = [{transform_indices = @transform_0, window_bounds = array<i64: 32, 32>}, {pipeline_mode = #tpu.pipeline_mode<synchronous>, transform_indices = @transform_1, window_bounds = array<i64: 128, 32>}, {pipeline_mode = #tpu.pipeline_mode<synchronous>, transform_indices = @transform_2, window_bounds = array<i64: 32, 128>}, {pipeline_mode = #tpu.pipeline_mode<synchronous>, transform_indices = @transform_3, window_bounds = array<i64: 1, 128>}, {transform_indices = @transform_4, window_bounds = array<i64: 32, 32>}, {transform_indices = @transform_5, window_bounds = array<i64: 1, 1, 128>}]} {
    %c0 = arith.constant 0 : index
    %c0_0 = arith.constant 0 : index
    %0 = vector.load %arg1[%c0, %c0_0] : memref<32x32xf32, #tpu.memory_space<vmem>>, vector<32x32xf32>
    %1 = arith.truncf %0 : vector<32x32xf32> to vector<32x32xbf16>
    %c0_1 = arith.constant 0 : index
    %c0_2 = arith.constant 0 : index
    %2 = vector.load %arg3[%c0_1, %c0_2] : memref<32x128xbf16, #tpu.memory_space<vmem>>, vector<32x128xbf16>
    %cst = arith.constant dense<0.000000e+00> : vector<32x128xf32>
    %3 = tpu.matmul %1, %2, %cst {dimension_numbers = #tpu.dot_dimension_numbers<[1], [0], [0], [1], [0, 0, 1, 1], [], []>} : vector<32x32xbf16>, vector<32x128xbf16>, vector<32x128xf32> -> vector<32x128xf32>
    %c0_3 = arith.constant 0 : index
    %c0_4 = arith.constant 0 : index
    %4 = vector.load %arg4[%c0_3, %c0_4] : memref<1x128xf32, #tpu.memory_space<vmem>>, vector<1x128xf32>
    %5 = vector.broadcast %4 : vector<1x128xf32> to vector<32x128xf32>
    %6 = arith.subf %3, %5 : vector<32x128xf32>
    %cst_5 = arith.constant dense<0xFF800000> : vector<32xf32>
    %7 = vector.multi_reduction <maximumf>, %6, %cst_5 [1] : vector<32x128xf32> to vector<32xf32>
    %8 = vector.shape_cast %7 : vector<32xf32> to vector<32x1xf32>
    %9 = vector.broadcast %8 : vector<32x1xf32> to vector<32x128xf32>
    %10 = arith.cmpf oge, %6, %9 : vector<32x128xf32>
    %11 = arith.extui %10 : vector<32x128xi1> to vector<32x128xi32>
    %12 = arith.sitofp %11 : vector<32x128xi32> to vector<32x128xf32>
    %cst_6 = arith.constant dense<0.000000e+00> : vector<32xf32>
    %13 = vector.multi_reduction <add>, %12, %cst_6 [1] : vector<32x128xf32> to vector<32xf32>
    %14 = vector.shape_cast %13 : vector<32xf32> to vector<32x1xf32>
    %c0_7 = arith.constant 0 : index
    %c0_8 = arith.constant 0 : index
    %15 = vector.load %arg2[%c0_7, %c0_8] : memref<128x32xf32, #tpu.memory_space<vmem>>, vector<128x32xf32>
    %cst_9 = arith.constant dense<0.000000e+00> : vector<32x32xf32>
    %16 = tpu.matmul %12, %15, %cst_9 {dimension_numbers = #tpu.dot_dimension_numbers<[1], [0], [0], [1], [0, 0, 1, 1], [], []>} : vector<32x128xf32>, vector<128x32xf32>, vector<32x32xf32> -> vector<32x32xf32>
    %cst_10 = arith.constant 1.000000e+00 : f32
    %17 = vector.broadcast %cst_10 : f32 to vector<32x1xf32>
    %18 = arith.divf %17, %14 : vector<32x1xf32>
    %19 = vector.broadcast %18 : vector<32x1xf32> to vector<32x32xf32>
    %20 = arith.mulf %16, %19 : vector<32x32xf32>
    %c0_11 = arith.constant 0 : index
    %c0_12 = arith.constant 0 : index
    %21 = vector.load %arg5[%c0_11, %c0_12] : memref<32x32xf32, #tpu.memory_space<vmem>>, vector<32x32xf32>
    tpu.vector_store %arg5[%c0_11, %c0_12], %20 {strides = array<i32>} : memref<32x32xf32, #tpu.memory_space<vmem>>, vector<32x32xf32>,
    %22 = arith.subf %20, %0 : vector<32x32xf32>
    %23 = arith.mulf %22, %22 : vector<32x32xf32>
    %cst_13 = arith.constant dense<0.000000e+00> : vector<32xf32>
    %24 = vector.multi_reduction <add>, %23, %cst_13 [0] : vector<32x32xf32> to vector<32xf32>
    %25 = vector.shape_cast %24 : vector<32xf32> to vector<1x32xf32>
    %cst_14 = arith.constant dense<0.000000e+00> : vector<1xf32>
    %26 = vector.multi_reduction <add>, %25, %cst_14 [1] : vector<1x32xf32> to vector<1xf32>
    %27 = vector.shape_cast %26 : vector<1xf32> to vector<1x1xf32>
    %28 = vector.shape_cast %27 : vector<1x1xf32> to vector<1x1x1xf32>
    %29 = vector.shape_cast %28 : vector<1x1x1xf32> to vector<1x1x1xf32>
    %30 = vector.broadcast %29 : vector<1x1x1xf32> to vector<1x1x128xf32>
    %c0_15 = arith.constant 0 : index
    %c0_16 = arith.constant 0 : index
    %c0_17 = arith.constant 0 : index
    %31 = vector.load %arg6[%c0_15, %c0_16, %c0_17] : memref<1x1x128xf32, #tpu.memory_space<vmem>>, vector<1x1x128xf32>
    tpu.vector_store %arg6[%c0_15, %c0_16, %c0_17], %30 {strides = array<i32>} : memref<1x1x128xf32, #tpu.memory_space<vmem>>, vector<1x1x128xf32>,
    return
  }
  func.func @transform_0(%arg0: i32) -> (i32, i32) {
    %c0_i32 = arith.constant 0 : i32
    %c0_i32_0 = arith.constant 0 : i32
    return %arg0, %c0_i32 : i32, i32
  }
  func.func @transform_1(%arg0: i32) -> (i32, i32) {
    %c0_i32 = arith.constant 0 : i32
    %c0_i32_0 = arith.constant 0 : i32
    %c0_i32_1 = arith.constant 0 : i32
    return %c0_i32, %c0_i32_0 : i32, i32
  }
  func.func @transform_2(%arg0: i32) -> (i32, i32) {
    %c0_i32 = arith.constant 0 : i32
    %c0_i32_0 = arith.constant 0 : i32
    %c0_i32_1 = arith.constant 0 : i32
    return %c0_i32, %c0_i32_0 : i32, i32
  }
  func.func @transform_3(%arg0: i32) -> (i32, i32) {
    %c0_i32 = arith.constant 0 : i32
    %c0_i32_0 = arith.constant 0 : i32
    %c0_i32_1 = arith.constant 0 : i32
    return %c0_i32, %c0_i32_0 : i32, i32
  }
  func.func @transform_4(%arg0: i32) -> (i32, i32) {
    %c0_i32 = arith.constant 0 : i32
    %c0_i32_0 = arith.constant 0 : i32
    return %arg0, %c0_i32 : i32, i32
  }
  func.func @transform_5(%arg0: i32) -> (i32, i32, i32) {
    %c0_i32 = arith.constant 0 : i32
    %c0_i32_0 = arith.constant 0 : i32
    %c0_i32_1 = arith.constant 0 : i32
    return %arg0, %c0_i32, %c0_i32_0 : i32, i32, i32
  }
}

</mosaic_0001>

<llo_original>
// kernel: vector_quantizer_forward.1
$region0: #{vector_quantizer_forward.1}
  #allocation0 [shape = 'u32[]', space=smem, size = 0x4, offset = 0x4, fixed_abs, tag = 'smem constant byte address 0x4 - core index']
  #allocation1 [shape = 'u32[144,128]{1,0:T(1,128)}', space=vmem, size = 0x12000, scoped, tag = 'internal scratch']
  %s0 = inlined_call_operand.vmem [shape: f32[64,32], index: 0, kind: input, shape index: {}]
  %s1 = inlined_call_operand.vmem [shape: f32[128,32], index: 1, kind: input, shape index: {}]
  %s2 = inlined_call_operand.vmem [shape: bf16[32,128], index: 2, kind: input, shape index: {}]
  %s3 = inlined_call_operand.vmem [shape: f32[1,128], index: 3, kind: input, shape index: {}]
  %s4 = inlined_call_operand.hbm [shape: f32[64,32], index: 4, kind: output, shape index: {0}]
  %s5 = inlined_call_operand.vmem [shape: f32[2,1,128], index: 5, kind: output, shape index: {1}]
  %6 = xla_tuple %s4, %s5
  %s7 = sld [smem:[#allocation0]]
  $region57: #{vector_quantizer_forward.1} parent=0
    _
  %s9 = ssub.s32 1, %s7
  %s10 = scalar_select 0, %s9, %s7
  $region1: #{vector_quantizer_forward.1} parent=0
    #allocation2 [shape = 'u8[32768]{0}', space=vmem, size = 0x8000, scoped, tag = 'output window, operand 0']
    #allocation3 [shape = 's32[2]{0}', space=sflag, size = 0x8, scoped, tag = 'scoped memory for vector_quantizer_forward.1']
    %11 = vsyncpa [#allocation3], 0
    %s12 = scalar_lea.sflag [#allocation3], 1
    %13 = vsyncpa %s12, 0
    loop: start=0, step=1, limit=4
    $region2: #{vector_quantizer_forward.1} parent=1 // loop_pre_header
      _
    $region3: #{vector_quantizer_forward.1} parent=1 // loop_header
      %s15 = sphi 0, %s19
      %p16 = scmp.ge.s32.totalorder %s15, 4
      %s25 = sphi 0, %s27
      %s28 = sphi 0, %s25
      %s29 = sphi 0, %s28
      %s45 = sphi 0, %s29
      %s49 = sphi 0, %s49
      %s51 = sphi 0, %s49
      %s52 = sphi 0, %s51
      %s66 = sphi 0, %s52
      %s70 = sphi 0, %s70
      %s72 = sphi 0, %s70
      %s73 = sphi 0, %s72
      %s87 = sphi 0, %s73
      %s91 = sphi 0, %s91
      %s93 = sphi 0, %s91
      %s94 = sphi 0, %s93
      %s108 = sphi 0, %s94
      %s114 = sphi 0, %s116
      %s117 = sphi 0, %s114
      %s118 = sphi 0, %s117
      %s134 = sphi 0, %s118
      %s140 = sphi 0, %s142
      %s143 = sphi 0, %s140
      %s144 = sphi 0, %s143
      %s160 = sphi 0, %s144
    $region4: #{vector_quantizer_forward.1} parent=1 // loop_header_branch
      %18 = sbr.rel (%p16) target = $region8
    $region5: #{vector_quantizer_forward.1} parent=1 // loop_body
      %s20 = ssub.s32 %s15, 1
      %s21 = ssub.s32 %s15, 2
      %s22 = sadd.s32 %s15, 1
      %s23 = ssub.s32 %s15, %s22
      %p24 = scmp.eq.s32.totalorder %s23, 0
      %s26 = sadd.s32 %s25, 1
      %s27 = scalar_select %p24, %s25, %s26
      %p30 = pneg %p24
      %p31 = scmp.eq.s32.totalorder %s15, 1
      %p32 = por %p30, %p31
      %p33 = scmp.ne.s32.totalorder %s25, %s28
      %p34 = scmp.eq.s32.totalorder %s15, 0
      %p35 = por %p33, %p34
      %p36 = scmp.ne.s32.totalorder %s25, %s28
      %p37 = scmp.eq.s32.totalorder %s20, 1
      %p38 = por %p36, %p37
      %p39 = scmp.ne.s32.totalorder %s28, %s29
      %p40 = scmp.eq.s32.totalorder %s20, 0
      %p41 = por %p39, %p40
      %p42 = scmp.ne.s32.totalorder %s28, %s29
      %p43 = scmp.eq.s32.totalorder %s21, 1
      %p44 = por %p42, %p43
      %p46 = scmp.ne.s32.totalorder %s29, %s45
      %p47 = scmp.eq.s32.totalorder %s21, 0
      %p48 = por %p46, %p47
      %s50 = sadd.s32 %s49, 1
      %p53 = scmp.eq.s32.totalorder %s15, 1
      %p54 = scmp.ne.s32.totalorder %s49, %s51
      %p55 = scmp.eq.s32.totalorder %s15, 0
      %p56 = por %p54, %p55
      %p57 = scmp.ne.s32.totalorder %s49, %s51
      %p58 = scmp.eq.s32.totalorder %s20, 1
      %p59 = por %p57, %p58
      %p60 = scmp.ne.s32.totalorder %s51, %s52
      %p61 = scmp.eq.s32.totalorder %s20, 0
      %p62 = por %p60, %p61
      %p63 = scmp.ne.s32.totalorder %s51, %s52
      %p64 = scmp.eq.s32.totalorder %s21, 1
      %p65 = por %p63, %p64
      %p67 = scmp.ne.s32.totalorder %s52, %s66
      %p68 = scmp.eq.s32.totalorder %s21, 0
      %p69 = por %p67, %p68
      %s71 = sadd.s32 %s70, 1
      %p74 = scmp.eq.s32.totalorder %s15, 1
      %p75 = scmp.ne.s32.totalorder %s70, %s72
      %p76 = scmp.eq.s32.totalorder %s15, 0
      %p77 = por %p75, %p76
      %p78 = scmp.ne.s32.totalorder %s70, %s72
      %p79 = scmp.eq.s32.totalorder %s20, 1
      %p80 = por %p78, %p79
      %p81 = scmp.ne.s32.totalorder %s72, %s73
      %p82 = scmp.eq.s32.totalorder %s20, 0
      %p83 = por %p81, %p82
      %p84 = scmp.ne.s32.totalorder %s72, %s73
      %p85 = scmp.eq.s32.totalorder %s21, 1
      %p86 = por %p84, %p85
      %p88 = scmp.ne.s32.totalorder %s73, %s87
      %p89 = scmp.eq.s32.totalorder %s21, 0
      %p90 = por %p88, %p89
      %s92 = sadd.s32 %s91, 1
      %p95 = scmp.eq.s32.totalorder %s15, 1
      %p96 = scmp.ne.s32.totalorder %s91, %s93
      %p97 = scmp.eq.s32.totalorder %s15, 0
      %p98 = por %p96, %p97
      %p99 = scmp.ne.s32.totalorder %s91, %s93
      %p100 = scmp.eq.s32.totalorder %s20, 1
      %p101 = por %p99, %p100
      %p102 = scmp.ne.s32.totalorder %s93, %s94
      %p103 = scmp.eq.s32.totalorder %s20, 0
      %p104 = por %p102, %p103
      %p105 = scmp.ne.s32.totalorder %s93, %s94
      %p106 = scmp.eq.s32.totalorder %s21, 1
      %p107 = por %p105, %p106
      %p109 = scmp.ne.s32.totalorder %s94, %s108
      %p110 = scmp.eq.s32.totalorder %s21, 0
      %p111 = por %p109, %p110
      %s112 = ssub.s32 %s15, %s22
      %p113 = scmp.eq.s32.totalorder %s112, 0
      %s115 = sadd.s32 %s114, 1
      %s116 = scalar_select %p113, %s114, %s115
      %p119 = pneg %p113
      %p120 = scmp.eq.s32.totalorder %s15, 1
      %p121 = por %p119, %p120
      %p122 = scmp.ne.s32.totalorder %s114, %s117
      %p123 = scmp.eq.s32.totalorder %s15, 0
      %p124 = por %p122, %p123
      %p125 = scmp.ne.s32.totalorder %s114, %s117
      %p126 = scmp.eq.s32.totalorder %s20, 1
      %p127 = por %p125, %p126
      %p128 = scmp.ne.s32.totalorder %s117, %s118
      %p129 = scmp.eq.s32.totalorder %s20, 0
      %p130 = por %p128, %p129
      %p131 = scmp.ne.s32.totalorder %s117, %s118
      %p132 = scmp.eq.s32.totalorder %s21, 1
      %p133 = por %p131, %p132
      %p135 = scmp.ne.s32.totalorder %s118, %s134
      %p136 = scmp.eq.s32.totalorder %s21, 0
      %p137 = por %p135, %p136
      %s138 = ssub.s32 %s15, %s22
      %p139 = scmp.eq.s32.totalorder %s138, 0
      %s141 = sadd.s32 %s140, 1
      %s142 = scalar_select %p139, %s140, %s141
      %p145 = pneg %p139
      %p146 = scmp.eq.s32.totalorder %s15, 1
      %p147 = por %p145, %p146
      %p148 = scmp.ne.s32.totalorder %s140, %s143
      %p149 = scmp.eq.s32.totalorder %s15, 0
      %p150 = por %p148, %p149
      %p151 = scmp.ne.s32.totalorder %s140, %s143
      %p152 = scmp.eq.s32.totalorder %s20, 1
      %p153 = por %p151, %p152
      %p154 = scmp.ne.s32.totalorder %s143, %s144
      %p155 = scmp.eq.s32.totalorder %s20, 0
      %p156 = por %p154, %p155
      %p157 = scmp.ne.s32.totalorder %s143, %s144
      %p158 = scmp.eq.s32.totalorder %s21, 1
      %p159 = por %p157, %p158
      %p161 = scmp.ne.s32.totalorder %s144, %s160
      %p162 = scmp.eq.s32.totalorder %s21, 0
      %p163 = por %p161, %p162
      %p164 = scmp.le.s32.totalorder 1, %s15
      %p165 = scmp.lt.s32.totalorder %s15, 3
      %p166 = pnand %p164, %p165
      %p167 = pneg %p166
      // Predicated region
      $region9: #{vector_quantizer_forward.1} parent=5 // pred_check
        _
      $region10: #{vector_quantizer_forward.1} parent=5 // pred_check_branch
        %169 = sbr.rel (%p166) target = $region12
      $region11: #{vector_quantizer_forward.1} parent=5 // pred_region
        %s170 = ssub.s32 %s15, 1
        // Predicated region
        $region13: #{vector_quantizer_forward.1} parent=11 // pred_check
          %p171 = pneg %p62
        $region14: #{vector_quantizer_forward.1} parent=11 // pred_check_branch
          %173 = sbr.rel (%p171) target = $region16
        $region15: #{vector_quantizer_forward.1} parent=11 // pred_region
          _
        $region16: #{vector_quantizer_forward.1} parent=11 // pred_fallthru
          _
        // Predicated region
        $region17: #{vector_quantizer_forward.1} parent=11 // pred_check
          %p174 = pneg %p83
        $region18: #{vector_quantizer_forward.1} parent=11 // pred_check_branch
          %176 = sbr.rel (%p174) target = $region20
        $region19: #{vector_quantizer_forward.1} parent=11 // pred_region
          _
        $region20: #{vector_quantizer_forward.1} parent=11 // pred_fallthru
          _
        // Predicated region
        $region21: #{vector_quantizer_forward.1} parent=11 // pred_check
          %p177 = pneg %p104
        $region22: #{vector_quantizer_forward.1} parent=11 // pred_check_branch
          %179 = sbr.rel (%p177) target = $region24
        $region23: #{vector_quantizer_forward.1} parent=11 // pred_region
          _
        $region24: #{vector_quantizer_forward.1} parent=11 // pred_fallthru
          _
      $region12: #{vector_quantizer_forward.1} parent=5 // pred_fallthru
        _
      %p180 = scmp.lt.s32.totalorder %s15, 2
      // Predicated region
      $region25: #{vector_quantizer_forward.1} parent=5 // pred_check
        %p181 = pneg %p180
      $region26: #{vector_quantizer_forward.1} parent=5 // pred_check_branch
        %183 = sbr.rel (%p181) target = $region28
      $region27: #{vector_quantizer_forward.1} parent=5 // pred_region
        // Predicated region
        $region29: #{vector_quantizer_forward.1} parent=27 // pred_check
          %p184 = pneg %p35
        $region30: #{vector_quantizer_forward.1} parent=27 // pred_check_branch
          %186 = sbr.rel (%p184) target = $region32
        $region31: #{vector_quantizer_forward.1} parent=27 // pred_region
          %s187 = smul.u32 4, %s15
          %p188 = scmp.lt.s32.totalorder %s187, 7
          %s189 = scalar_select %p188, %s187, 7
          %s190 = smul.addr %s189, 8
          %s191 = scalar_lea.vmem %s0, %s190
          %s192 = smul.u32 4, %s15
        $region32: #{vector_quantizer_forward.1} parent=27 // pred_fallthru
          _
      $region28: #{vector_quantizer_forward.1} parent=5 // pred_fallthru
        _
      %p193 = scmp.le.s32.totalorder 1, %s15
      %p194 = scmp.lt.s32.totalorder %s15, 3
      %p195 = pnand %p193, %p194
      %p196 = pneg %p195
      // Predicated region
      $region33: #{vector_quantizer_forward.1} parent=5 // pred_check
        _
      $region34: #{vector_quantizer_forward.1} parent=5 // pred_check_branch
        %198 = sbr.rel (%p195) target = $region36
      $region35: #{vector_quantizer_forward.1} parent=5 // pred_region
        %s199 = ssub.s32 %s15, 1
        %s200 = smul.u32 4, %s20
        %p201 = scmp.lt.s32.totalorder %s200, 7
        %s202 = scalar_select %p201, %s200, 7
        %s203 = smul.addr %s202, 8
        %s204 = scalar_lea.vmem %s0, %s203
        %p205 = pneg %p41
        %p206 = pneg %p38
        %p207 = pneg %p62
        %p208 = pneg %p59
        %p209 = pneg %p83
        %p210 = pneg %p80
        %p211 = pneg %p104
        %p212 = pneg %p101
        %p213 = pneg %p130
        %p214 = pneg %p127
        %s215 = sand.u32 %s117, 1
        %s216 = scalar_lea.sflag [#allocation3], %s215
        %s217 = sand.u32 %s117, 1
        %s218 = smul.addr %s217, 32
        %s219 = scalar_lea.vmem [#allocation2], %s218
        %p220 = pneg %p156
        %p221 = pneg %p153
        %p222 = scmp.lt.s32.totalorder %s20, 1
        %s223 = scalar_select %p222, %s20, 1
        %s224 = scalar_lea.vmem %s5, %s223
        %s225 = smul.u32 4, %s20
        %p226 = scmp.lt.s32.totalorder %s225, 7
        %s227 = scalar_select %p226, %s225, 7
        %s228 = smul.addr %s227, 8
        %s229 = scalar_lea.vmem %s0, %s228
        %s230 = smul.u32 4, %s20
        %s231 = smul.u32 4, %s20
        %p232 = scmp.lt.s32.totalorder %s20, 1
        %s233 = scalar_select %p232, %s20, 1
        %s234 = scalar_lea.vmem %s5, %s233
        %v236 = vld [vmem:[%s229] sm:$0xff]
        %v237 = vld [vmem:[%s229 + $0x8] sm:$0xff]
        %v238 = vld [vmem:[%s229 + $0x10] sm:$0xff]
        %v239 = vld [vmem:[%s229 + $0x18] sm:$0xff]
        %v240 = vpack.c.bf16 %v237, %v236
        %v241 = vpack.c.bf16 %v239, %v238
        %v242 = vld [vmem:[%s2] sm:$0xf]
        %v243 = vld [vmem:[%s2 + $0x4] sm:$0xf]
        %v244 = vld [vmem:[%s2 + $0x8] sm:$0xf]
        %v245 = vld [vmem:[%s2 + $0xc] sm:$0xf]
        %v250 = vunpack.c.l.b16 %v242
        %v251 = vunpack.c.l.b16 %v243
        %v252 = vunpack.c.l.b16 %v244
        %v253 = vunpack.c.l.b16 %v245
        %v254 = vpack.c.b16 %v251, %v250
        %v255 = vpack.c.b16 %v253, %v252
        %vm258 = vcmask 261120
        %v260 = vsel %vm258, %v240, 0
        %v263 = vsel %vm258, %v241, 0
        %265 = vmatprep.subr.bf16.mxu0 0
        %266 = vmatpush1.bf16.msra.mxu0 %v254
        %267 = vmatprep.subr.bf16.mxu0 0
        %268 = vmatpush1.bf16.msra.mxu0 %v255
        %269 = vmatprep.subr.bf16.mxu0 0
        %270 = vmatpush1.bf16.msra.mxu0 0
        %271 = vmatprep.subr.bf16.mxu0 0
        %272 = vmatpush1.bf16.msra.mxu0 0
        %273 = vmatprep.subr.bf16.mxu0 0
        %274 = vmatpush1.bf16.msra.mxu0 0
        %275 = vmatprep.subr.bf16.mxu0 0
        %276 = vmatpush1.bf16.msra.mxu0 0
        %277 = vmatprep.subr.bf16.mxu0 0
        %278 = vmatpush1.bf16.msra.mxu0 0
        %279 = vmatprep.subr.bf16.mxu0 0
        %280 = vmatpush1.bf16.msra.mxu0 0
        %281 = vmatprep.subr.bf16.mxu0 0
        %282 = vmatpush1.bf16.msra.mxu0 0
        %283 = vmatprep.subr.bf16.mxu0 0
        %284 = vmatpush1.bf16.msra.mxu0 0
        %285 = vmatprep.subr.bf16.mxu0 0
        %286 = vmatpush1.bf16.msra.mxu0 0
        %287 = vmatprep.subr.bf16.mxu0 0
        %288 = vmatpush1.bf16.msra.mxu0 0
        %289 = vmatprep.subr.bf16.mxu0 0
        %290 = vmatpush1.bf16.msra.mxu0 0
        %291 = vmatprep.subr.bf16.mxu0 0
        %292 = vmatpush1.bf16.msra.mxu0 0
        %293 = vmatprep.subr.bf16.mxu0 0
        %294 = vmatpush1.bf16.msra.mxu0 0
        %295 = vmatprep.subr.bf16.mxu0 0
        %296 = vmatpush1.bf16.msra.mxu0 0
        %297 = vmatprep.mubr.bf16.mxu0 0
        %298 = vmatmul.mubr.bf16.gmra.mrb[0].mxu0 %v260
        %v299 = vpop.f32.mrb[0].mxu0
        %v300 = vadd.f32 0.0, %v299
        %v301 = vpop.f32.mrb[0].mxu0
        %v302 = vpop.f32.mrb[0].mxu0
        %v303 = vadd.f32 0.0, %v302
        %v304 = vpop.f32.mrb[0].mxu0
        %305 = vmatprep.mubr.bf16.mxu0 0
        %306 = vmatmul.mubr.bf16.gmra.mrb[0].mxu0 %v263
        %v307 = vpop.f32.mrb[0].mxu0
        %v308 = vadd.f32 0.0, %v307
        %v309 = vpop.f32.mrb[0].mxu0
        %v310 = vpop.f32.mrb[0].mxu0
        %v311 = vadd.f32 0.0, %v310
        %v312 = vpop.f32.mrb[0].mxu0
        %313 = vdwg.mxu0
        %v314 = vld [vmem:[%s3] sm:$0x1]
        %v316 = vlaneseq
        %v317 = vshrl.u32 %v316, 7
        %v318 = vsub.s32 0, %v317
        %v319 = vrot.slane %v314, %v318
        %v321 = vsub.f32 %v300, %v319
        %v322 = vsub.f32 %v303, %v319
        %v323 = vsub.f32 %v308, %v319
        %v324 = vsub.f32 %v311, %v319
        %325 = vmax.xlane.f32.xlu0 %v321
        %v326 = vpop.xlane.xlu0 %325
        %327 = vmax.xlane.f32.xlu0 %v322
        %v328 = vpop.xlane.xlu0 %327
        %329 = vmax.xlane.f32.xlu0 %v323
        %v330 = vpop.xlane.xlu0 %329
        %331 = vmax.xlane.f32.xlu0 %v324
        %v332 = vpop.xlane.xlu0 %331
        %vm333 = vcmp.ge.f32.partialorder %v321, %v326
        %vm334 = vcmp.ge.f32.partialorder %v322, %v328
        %vm335 = vcmp.ge.f32.partialorder %v323, %v330
        %vm336 = vcmp.ge.f32.partialorder %v324, %v332
        %v337 = vsel %vm333, 1, 0
        %v338 = vsel %vm334, 1, 0
        %v339 = vsel %vm335, 1, 0
        %v340 = vsel %vm336, 1, 0
        %v341 = vcvt.s32.f32 %v337
        %v342 = vcvt.s32.f32 %v338
        %v343 = vcvt.s32.f32 %v339
        %v344 = vcvt.s32.f32 %v340
        %345 = vadd.xlane.f32.xlu0 %v341
        %v346 = vpop.xlane.xlu0 %345
        %347 = vadd.xlane.f32.xlu0 %v342
        %v348 = vpop.xlane.xlu0 %347
        %349 = vadd.xlane.f32.xlu0 %v343
        %v350 = vpop.xlane.xlu0 %349
        %351 = vadd.xlane.f32.xlu0 %v344
        %v352 = vpop.xlane.xlu0 %351
        %v353 = vld [vmem:[%s1] sm:$0xff]
        %v354 = vld [vmem:[%s1 + $0x8] sm:$0xff]
        %v355 = vld [vmem:[%s1 + $0x10] sm:$0xff]
        %v356 = vld [vmem:[%s1 + $0x18] sm:$0xff]
        %v357 = vld [vmem:[%s1 + $0x20] sm:$0xff]
        %v358 = vld [vmem:[%s1 + $0x28] sm:$0xff]
        %v359 = vld [vmem:[%s1 + $0x30] sm:$0xff]
        %v360 = vld [vmem:[%s1 + $0x38] sm:$0xff]
        %v361 = vld [vmem:[%s1 + $0x40] sm:$0xff]
        %v362 = vld [vmem:[%s1 + $0x48] sm:$0xff]
        %v363 = vld [vmem:[%s1 + $0x50] sm:$0xff]
        %v364 = vld [vmem:[%s1 + $0x58] sm:$0xff]
        %v365 = vld [vmem:[%s1 + $0x60] sm:$0xff]
        %v366 = vld [vmem:[%s1 + $0x68] sm:$0xff]
        %v367 = vld [vmem:[%s1 + $0x70] sm:$0xff]
        %v368 = vld [vmem:[%s1 + $0x78] sm:$0xff]
        %369 = vmatprep.subr.mxu0 0.0
        %370 = vmatpush1.msra.mxu0 %v353
        %371 = vmatprep.subr.mxu0 0.0
        %372 = vmatpush1.msra.mxu0 %v354
        %373 = vmatprep.subr.mxu0 0.0
        %374 = vmatpush1.msra.mxu0 %v355
        %375 = vmatprep.subr.mxu0 0.0
        %376 = vmatpush1.msra.mxu0 %v356
        %377 = vmatprep.subr.mxu0 0.0
        %378 = vmatpush1.msra.mxu0 %v357
        %379 = vmatprep.subr.mxu0 0.0
        %380 = vmatpush1.msra.mxu0 %v358
        %381 = vmatprep.subr.mxu0 0.0
        %382 = vmatpush1.msra.mxu0 %v359
        %383 = vmatprep.subr.mxu0 0.0
        %384 = vmatpush1.msra.mxu0 %v360
        %385 = vmatprep.subr.mxu0 0.0
        %386 = vmatpush1.msra.mxu0 %v361
        %387 = vmatprep.subr.mxu0 0.0
        %388 = vmatpush1.msra.mxu0 %v362
        %389 = vmatprep.subr.mxu0 0.0
        %390 = vmatpush1.msra.mxu0 %v363
        %391 = vmatprep.subr.mxu0 0.0
        %392 = vmatpush1.msra.mxu0 %v364
        %393 = vmatprep.subr.mxu0 0.0
        %394 = vmatpush1.msra.mxu0 %v365
        %395 = vmatprep.subr.mxu0 0.0
        %396 = vmatpush1.msra.mxu0 %v366
        %397 = vmatprep.subr.mxu0 0.0
        %398 = vmatpush1.msra.mxu0 %v367
        %399 = vmatprep.subr.mxu0 0.0
        %400 = vmatpush1.msra.mxu0 %v368
        %401 = vmatprep.subr.mxu0 0.0
        %402 = vmatpush1.msra.mxu0 0.0
        %403 = vmatprep.subr.mxu0 0.0
        %404 = vmatpush1.msra.mxu0 0.0
        %405 = vmatprep.subr.mxu0 0.0
        %406 = vmatpush1.msra.mxu0 0.0
        %407 = vmatprep.subr.mxu0 0.0
        %408 = vmatpush1.msra.mxu0 0.0
        %409 = vmatprep.subr.mxu0 0.0
        %410 = vmatpush1.msra.mxu0 0.0
        %411 = vmatprep.subr.mxu0 0.0
        %412 = vmatpush1.msra.mxu0 0.0
        %413 = vmatprep.subr.mxu0 0.0
        %414 = vmatpush1.msra.mxu0 0.0
        %415 = vmatprep.subr.mxu0 0.0
        %416 = vmatpush1.msra.mxu0 0.0
        %417 = vmatprep.subr.mxu0 0.0
        %418 = vmatpush1.msra.mxu0 0.0
        %419 = vmatprep.subr.mxu0 0.0
        %420 = vmatpush1.msra.mxu0 0.0
        %421 = vmatprep.subr.mxu0 0.0
        %422 = vmatpush1.msra.mxu0 0.0
        %423 = vmatprep.subr.mxu0 0.0
        %424 = vmatpush1.msra.mxu0 0.0
        %425 = vmatprep.subr.mxu0 0.0
        %426 = vmatpush1.msra.mxu0 0.0
        %427 = vmatprep.subr.mxu0 0.0
        %428 = vmatpush1.msra.mxu0 0.0
        %429 = vmatprep.subr.mxu0 0.0
        %430 = vmatpush1.msra.mxu0 0.0
        %431 = vmatprep.subr.mxu0 0.0
        %432 = vmatpush1.msra.mxu0 0.0
        %433 = vmatprep.mubr.f32.mxu0 0.0
        %434 = vmatmul.mubr.f32.gmra.mrb[0].mxu0 %v341
        %v435 = vpop.f32.mrb[0].mxu0
        %v436 = vadd.f32 0.0, %v435
        %v437 = vpop.f32.mrb[0].mxu0
        %438 = vmatprep.mubr.f32.mxu0 0.0
        %439 = vmatmul.mubr.f32.gmra.mrb[0].mxu0 %v342
        %v440 = vpop.f32.mrb[0].mxu0
        %v441 = vadd.f32 0.0, %v440
        %v442 = vpop.f32.mrb[0].mxu0
        %443 = vmatprep.mubr.f32.mxu0 0.0
        %444 = vmatmul.mubr.f32.gmra.mrb[0].mxu0 %v343
        %v445 = vpop.f32.mrb[0].mxu0
        %v446 = vadd.f32 0.0, %v445
        %v447 = vpop.f32.mrb[0].mxu0
        %448 = vmatprep.mubr.f32.mxu0 0.0
        %449 = vmatmul.mubr.f32.gmra.mrb[0].mxu0 %v344
        %v450 = vpop.f32.mrb[0].mxu0
        %v451 = vadd.f32 0.0, %v450
        %v452 = vpop.f32.mrb[0].mxu0
        %453 = vdwg.mxu0
        %v454 = vrcp.pop %v346
        %v455 = vmul.f32 1.0, %v454
        %v456 = vrcp.pop %v348
        %v457 = vmul.f32 1.0, %v456
        %v458 = vrcp.pop %v350
        %v459 = vmul.f32 1.0, %v458
        %v460 = vrcp.pop %v352
        %v461 = vmul.f32 1.0, %v460
        %v462 = vmul.f32 %v436, %v455
        %v463 = vmul.f32 %v441, %v457
        %v464 = vmul.f32 %v446, %v459
        %v465 = vmul.f32 %v451, %v461
        %466 = vst.msk [vmem:[%s219] sm:$0xff] %vm258, %v462
        %467 = vst.msk [vmem:[%s219 + $0x8] sm:$0xff] %vm258, %v463
        %468 = vst.msk [vmem:[%s219 + $0x10] sm:$0xff] %vm258, %v464
        %469 = vst.msk [vmem:[%s219 + $0x18] sm:$0xff] %vm258, %v465
        %v470 = vsub.f32 %v462, %v236
        %v471 = vsub.f32 %v463, %v237
        %v472 = vsub.f32 %v464, %v238
        %v473 = vsub.f32 %v465, %v239
        %v474 = vmul.f32 %v470, %v470
        %v475 = vmul.f32 %v471, %v471
        %v476 = vmul.f32 %v472, %v472
        %v477 = vmul.f32 %v473, %v473
        %v478 = vsel %vm258, %v474, 0.0
        %v479 = vsel %vm258, %v475, 0.0
        %v480 = vadd.f32 %v478, %v479
        %v481 = vsel %vm258, %v476, 0.0
        %v482 = vadd.f32 %v480, %v481
        %v483 = vsel %vm258, %v477, 0.0
        %v484 = vadd.f32 %v482, %v483
        %v485 = vrot.slane %v484, 4
        %v486 = vadd.f32 %v484, %v485
        %v487 = vrot.slane %v486, 2
        %v488 = vadd.f32 %v486, %v487
        %v489 = vrot.slane %v488, 1
        %v490 = vadd.f32 %v488, %v489
        %v491 = vsel %vm258, %v490, 0.0
        %492 = vadd.xlane.f32.xlu0 %v491
        %v493 = vpop.xlane.xlu0 %492
        %494 = vst [vmem:[%s234] sm:$0x1] %v493
        %s495 = sand.u32 %s117, 1
        %s496 = scalar_lea.sflag [#allocation3], %s495
        %s497 = sand.u32 %s117, 1
        %s498 = smul.addr %s497, 32
        %s499 = scalar_lea.vmem [#allocation2], %s498
        %p500 = scmp.lt.s32.totalorder %s20, 1
        %s501 = scalar_select %p500, %s20, 1
        %s502 = scalar_lea.vmem %s5, %s501
        // Predicated region
        $region37: #{vector_quantizer_forward.1} parent=35 // pred_check
          %p503 = pneg %p127
        $region38: #{vector_quantizer_forward.1} parent=35 // pred_check_branch
          %505 = sbr.rel (%p503) target = $region40
        $region39: #{vector_quantizer_forward.1} parent=35 // pred_region
          %s506 = smul.u32 4, %s20
          %s508 = ssub.s32 512, 512
          %509 = vsyncadd %s496, %s508
          %s510 = smul.addr %s506, 128
          %s511 = scalar_lea.hbm %s4, %s510
          %s512 = sshll.u32 %s499, 4
          %s513 = int_to_ptr.vmem [resolvable:$true] %s512
          %518 = dma.vmem_to_hbm [thread:$0]  %s513, 512, %s511, %s496, 128, 128, 8
        $region40: #{vector_quantizer_forward.1} parent=35 // pred_fallthru
          _
        // Predicated region
        $region41: #{vector_quantizer_forward.1} parent=35 // pred_check
          %p519 = pneg %p153
        $region42: #{vector_quantizer_forward.1} parent=35 // pred_check_branch
          %521 = sbr.rel (%p519) target = $region44
        $region43: #{vector_quantizer_forward.1} parent=35 // pred_region
          _
        $region44: #{vector_quantizer_forward.1} parent=35 // pred_fallthru
          _
      $region36: #{vector_quantizer_forward.1} parent=5 // pred_fallthru
        _
      %p522 = scmp.le.s32.totalorder 2, %s15
      // Predicated region
      $region45: #{vector_quantizer_forward.1} parent=5 // pred_check
        %p523 = pneg %p522
      $region46: #{vector_quantizer_forward.1} parent=5 // pred_check_branch
        %525 = sbr.rel (%p523) target = $region48
      $region47: #{vector_quantizer_forward.1} parent=5 // pred_region
        %s526 = ssub.s32 %s15, 2
        // Predicated region
        $region49: #{vector_quantizer_forward.1} parent=47 // pred_check
          %p527 = pneg %p133
        $region50: #{vector_quantizer_forward.1} parent=47 // pred_check_branch
          %529 = sbr.rel (%p527) target = $region52
        $region51: #{vector_quantizer_forward.1} parent=47 // pred_region
          %s530 = sand.u32 %s118, 1
          %s531 = scalar_lea.sflag [#allocation3], %s530
          %s532 = sand.u32 %s118, 1
          %s533 = smul.addr %s532, 32
          %s534 = scalar_lea.vmem [#allocation2], %s533
          %535 = dma.done %s531, 512
        $region52: #{vector_quantizer_forward.1} parent=47 // pred_fallthru
          _
        // Predicated region
        $region53: #{vector_quantizer_forward.1} parent=47 // pred_check
          %p536 = pneg %p159
        $region54: #{vector_quantizer_forward.1} parent=47 // pred_check_branch
          %538 = sbr.rel (%p536) target = $region56
        $region55: #{vector_quantizer_forward.1} parent=47 // pred_region
          %p539 = scmp.lt.s32.totalorder %s21, 1
          %s540 = scalar_select %p539, %s21, 1
          %s541 = scalar_lea.vmem %s5, %s540
        $region56: #{vector_quantizer_forward.1} parent=47 // pred_fallthru
          _
      $region48: #{vector_quantizer_forward.1} parent=5 // pred_fallthru
        _
    $region6: #{vector_quantizer_forward.1} parent=1 // loop_footer
      %s19 = sadd.s32 1, %s15
    $region7: #{vector_quantizer_forward.1} parent=1 // loop_footer_branch
      %14 = sbr.rel target = $region3
    $region8: #{vector_quantizer_forward.1} parent=1 // loop_exit
      _
    %542 = vsyncpa [#allocation3], 1
    %s543 = scalar_lea.sflag [#allocation3], 1
    %544 = vsyncpa %s543, 1

</llo_original>
